<compile_context>
chip_gen: v5e
topology: v5e:2x2
jax: 0.10.0
libtpu: 0.0.40
codegen_flags: <defaults>
</compile_context>

<pallas_src>
import jax
import jax.numpy as jnp
from jax.experimental import pallas as pl
from jax.experimental.pallas import tpu as pltpu

IN_FEATURES = 3
OUT_FEATURES = 8

# tanh argument scale (matches the PyTorch source constants)
_C = 0.044715 * 0.7978845608028654

# Batch tile (lane dimension).  Budget is dominated by the lane-padded (tb, 8)
# output VMEM block (tb/8 * 4 KiB per buffer, double-buffered):
#   tb=16384 -> out 16 MiB + in (3, tb) 1 MiB + elementwise/transpose temps
# which stays comfortably under the explicit 40 MiB scoped-VMEM request below on
# all of v5e / v6e (128 MiB physical) and v7x (64 MiB physical per TC).
_TILE_B = 16384
_VMEM_LIMIT_BYTES = 40 * 1024 * 1024

# Below this batch size the kernel is pure launch/grid-step overhead; let XLA
# fuse.  With the output transpose removed the crossover is lower than before.
_PALLAS_MIN_BATCH = 512


def _model_kernel(w_ref, b_ref, x_ref, o_ref):
    """w_ref: (8, 3) f32 VMEM, b_ref: (8, 1) f32 VMEM,
       x_ref: (3, tb) f32 VMEM (batch on lanes), o_ref: (tb, 8) f32 VMEM."""
    x0 = x_ref[0:1, :]          # (1, tb), lane-dense
    x1 = x_ref[1:2, :]
    x2 = x_ref[2:3, :]

    # v1 = W @ x + b as three dense broadcast FMAs on an (8, tb) tile:
    # (1, tb) input row broadcast over sublanes  *  (8, 1) weight column
    # broadcast over lanes.  All work stays on the VPU (no MXU push/pop, no
    # per-output-row loop, no concatenate relayout).
    v1 = (x0 * w_ref[:, 0:1]
          + x1 * w_ref[:, 1:2]
          + x2 * w_ref[:, 2:3]
          + b_ref[...])                                   # (8, tb)

    # Elementwise epilogue; tanh goes to the EUP slot.
    y = (0.5 * v1) * (1.0 + jnp.tanh(v1 * _C))            # (8, tb)

    # Transpose the finished slab on-chip (XLU slot is otherwise idle) so the
    # store lands directly in (B, 8) layout -- no wrapper-side transpose pass.
    o_ref[...] = jnp.transpose(y)                         # (tb, 8)


def model_forward_pallas_t(x_t, w, b):
    """Preferred entry point: x_t is (IN, B) f32 (batch on lanes).

    Producers that can emit this layout pay no wrapper transposes at all;
    HBM traffic is just the kernel's own 12 B in + 32 B out per row.
    Returns (B, OUT) f32.
    """
    assert x_t.shape[0] == IN_FEATURES
    B = x_t.shape[1]
    tb = B if B <= _TILE_B else _TILE_B          # full-dim block or 128-aligned tile
    grid = (pl.cdiv(B, tb),)

    b2 = b.reshape(OUT_FEATURES, 1)

    return pl.pallas_call(
        _model_kernel,
        out_shape=jax.ShapeDtypeStruct((B, OUT_FEATURES), jnp.float32),
        grid=grid,
        in_specs=[
            # Tiny constant blocks, resident in VMEM across all grid steps.
            pl.BlockSpec((OUT_FEATURES, IN_FEATURES), lambda i: (0, 0)),  # w (8,3)
            pl.BlockSpec((OUT_FEATURES, 1), lambda i: (0, 0)),            # b (8,1)
            # Pipelined lane-dense input tile.
            pl.BlockSpec((IN_FEATURES, tb), lambda i: (0, i)),            # x (3,tb)
        ],
        # Output stored directly in (B, 8) layout, one (tb, 8) slab per step.
        out_specs=pl.BlockSpec((tb, OUT_FEATURES), lambda i: (i, 0)),
        compiler_params=pltpu.CompilerParams(
            dimension_semantics=("parallel",),   # shard batch tiles across TCs (v7x)
            vmem_limit_bytes=_VMEM_LIMIT_BYTES,
        ),
        cost_estimate=pl.CostEstimate(
            flops=int(10 * OUT_FEATURES * B),
            transcendentals=int(OUT_FEATURES * B),
            bytes_accessed=int(4 * (IN_FEATURES + OUT_FEATURES) * B),
        ),
    )(w, b2, x_t)


def model_forward_pallas(x, w, b):
    """Module-contract entry point: x is (B, IN) f32 -> (B, OUT) f32.

    Pays one input transpose (~24 B/row); use model_forward_pallas_t to avoid it.
    """
    return model_forward_pallas_t(jnp.transpose(x), w, b)


def reference_forward(x, w, b):
    v1 = x @ jnp.transpose(w) + b
    return (0.5 * v1) * (1.0 + jnp.tanh(v1 * _C))


def model_forward(x, w, b):
    """Dispatching wrapper: tiny batches are faster as a fused XLA expression."""
    if x.shape[0] < _PALLAS_MIN_BATCH:
        return reference_forward(x, w, b)
    return model_forward_pallas(x, w, b)


if __name__ == "__main__":
    key = jax.random.PRNGKey(0)
    kx, kw, kb = jax.random.split(key, 3)

    # PyTorch Linear init scheme: U(-k, k), k = 1/sqrt(in_features).
    bound = 1.0 / (IN_FEATURES ** 0.5)
    w = jax.random.uniform(kw, (OUT_FEATURES, IN_FEATURES), jnp.float32,
                           minval=-bound, maxval=bound)
    b = jax.random.uniform(kb, (OUT_FEATURES,), jnp.float32,
                           minval=-bound, maxval=bound)

    # Module-shaped input (B=1, as in the PyTorch source).  The dispatcher takes
    # the fused-XLA fallback at this size.
    x1 = jax.random.normal(kx, (1, IN_FEATURES), jnp.float32)
    out1 = jax.block_until_ready(model_forward(x1, w, b))
    ref1 = reference_forward(x1, w, b)
    assert out1.shape == (1, OUT_FEATURES)
    assert jnp.allclose(out1, ref1, atol=1e-5, rtol=1e-5), (out1, ref1)

    # Small batched input to exercise the Pallas kernel itself (128-aligned batch,
    # single grid step; same kernel code path as production tiles).
    xb = jax.random.normal(kx, (256, IN_FEATURES), jnp.float32)
    outb = jax.block_until_ready(model_forward_pallas(xb, w, b))
    refb = reference_forward(xb, w, b)
    assert outb.shape == (256, OUT_FEATURES)
    assert jnp.allclose(outb, refb, atol=1e-5, rtol=1e-5)

    print("KERNEL_OK")
</pallas_src>

<mosaic_0001>
module attributes {stable_mosaic.version = 11 : i64} {
  func.func @_model_kernel(%arg0: i32, %arg1: memref<8x3xf32, #tpu.memory_space<vmem>>, %arg2: memref<8x1xf32, #tpu.memory_space<vmem>>, %arg3: memref<3x256xf32, #tpu.memory_space<vmem>>, %arg4: memref<256x8xf32, #tpu.memory_space<vmem>>) attributes {dimension_semantics = [#tpu.dimension_semantics<parallel>], iteration_bounds = array<i64: 1>, scalar_prefetch = 0 : i64, scratch_operands = 0 : i64, tpu.core_type = #tpu.core_type<tc>, window_params = [{pipeline_mode = #tpu.pipeline_mode<synchronous>, transform_indices = @transform_0, window_bounds = array<i64: 8, 3>}, {pipeline_mode = #tpu.pipeline_mode<synchronous>, transform_indices = @transform_1, window_bounds = array<i64: 8, 1>}, {transform_indices = @transform_2, window_bounds = array<i64: 3, 256>}, {transform_indices = @transform_3, window_bounds = array<i64: 256, 8>}]} {
    %c0 = arith.constant 0 : index
    %c0_0 = arith.constant 0 : index
    %0 = vector.load %arg3[%c0, %c0_0] : memref<3x256xf32, #tpu.memory_space<vmem>>, vector<1x256xf32>
    %c1 = arith.constant 1 : index
    %c0_1 = arith.constant 0 : index
    %1 = vector.load %arg3[%c1, %c0_1] : memref<3x256xf32, #tpu.memory_space<vmem>>, vector<1x256xf32>
    %c2 = arith.constant 2 : index
    %c0_2 = arith.constant 0 : index
    %2 = vector.load %arg3[%c2, %c0_2] : memref<3x256xf32, #tpu.memory_space<vmem>>, vector<1x256xf32>
    %c0_3 = arith.constant 0 : index
    %c0_4 = arith.constant 0 : index
    %3 = vector.load %arg1[%c0_3, %c0_4] : memref<8x3xf32, #tpu.memory_space<vmem>>, vector<8x1xf32>
    %4 = vector.broadcast %0 : vector<1x256xf32> to vector<8x256xf32>
    %5 = vector.broadcast %3 : vector<8x1xf32> to vector<8x256xf32>
    %6 = arith.mulf %4, %5 : vector<8x256xf32>
    %c0_5 = arith.constant 0 : index
    %c1_6 = arith.constant 1 : index
    %7 = vector.load %arg1[%c0_5, %c1_6] : memref<8x3xf32, #tpu.memory_space<vmem>>, vector<8x1xf32>
    %8 = vector.broadcast %1 : vector<1x256xf32> to vector<8x256xf32>
    %9 = vector.broadcast %7 : vector<8x1xf32> to vector<8x256xf32>
    %10 = arith.mulf %8, %9 : vector<8x256xf32>
    %11 = arith.addf %6, %10 : vector<8x256xf32>
    %c0_7 = arith.constant 0 : index
    %c2_8 = arith.constant 2 : index
    %12 = vector.load %arg1[%c0_7, %c2_8] : memref<8x3xf32, #tpu.memory_space<vmem>>, vector<8x1xf32>
    %13 = vector.broadcast %2 : vector<1x256xf32> to vector<8x256xf32>
    %14 = vector.broadcast %12 : vector<8x1xf32> to vector<8x256xf32>
    %15 = arith.mulf %13, %14 : vector<8x256xf32>
    %16 = arith.addf %11, %15 : vector<8x256xf32>
    %c0_9 = arith.constant 0 : index
    %c0_10 = arith.constant 0 : index
    %17 = vector.load %arg2[%c0_9, %c0_10] : memref<8x1xf32, #tpu.memory_space<vmem>>, vector<8x1xf32>
    %18 = vector.broadcast %17 : vector<8x1xf32> to vector<8x256xf32>
    %19 = arith.addf %16, %18 : vector<8x256xf32>
    %cst = arith.constant 5.000000e-01 : f32
    %20 = vector.broadcast %cst : f32 to vector<8x256xf32>
    %21 = arith.mulf %20, %19 : vector<8x256xf32>
    %cst_11 = arith.constant 0.0356774069 : f32
    %22 = vector.broadcast %cst_11 : f32 to vector<8x256xf32>
    %23 = arith.mulf %19, %22 : vector<8x256xf32>
    %24 = math.tanh %23 : vector<8x256xf32>
    %cst_12 = arith.constant 1.000000e+00 : f32
    %25 = vector.broadcast %cst_12 : f32 to vector<8x256xf32>
    %26 = arith.addf %25, %24 : vector<8x256xf32>
    %27 = arith.mulf %21, %26 : vector<8x256xf32>
    %28 = tpu.transpose %27, [1, 0] : vector<8x256xf32> -> vector<256x8xf32>
    %c0_13 = arith.constant 0 : index
    %c0_14 = arith.constant 0 : index
    %29 = vector.load %arg4[%c0_13, %c0_14] : memref<256x8xf32, #tpu.memory_space<vmem>>, vector<256x8xf32>
    tpu.vector_store %arg4[%c0_13, %c0_14], %28 {strides = array<i32>} : memref<256x8xf32, #tpu.memory_space<vmem>>, vector<256x8xf32>,
    return
  }
  func.func @transform_0(%arg0: i32) -> (i32, i32) {
    %c0_i32 = arith.constant 0 : i32
    %c0_i32_0 = arith.constant 0 : i32
    %c0_i32_1 = arith.constant 0 : i32
    return %c0_i32, %c0_i32_0 : i32, i32
  }
  func.func @transform_1(%arg0: i32) -> (i32, i32) {
    %c0_i32 = arith.constant 0 : i32
    %c0_i32_0 = arith.constant 0 : i32
    %c0_i32_1 = arith.constant 0 : i32
    return %c0_i32, %c0_i32_0 : i32, i32
  }
  func.func @transform_2(%arg0: i32) -> (i32, i32) {
    %c0_i32 = arith.constant 0 : i32
    %c0_i32_0 = arith.constant 0 : i32
    return %c0_i32, %arg0 : i32, i32
  }
  func.func @transform_3(%arg0: i32) -> (i32, i32) {
    %c0_i32 = arith.constant 0 : i32
    %c0_i32_0 = arith.constant 0 : i32
    return %arg0, %c0_i32 : i32, i32
  }
}

</mosaic_0001>

<llo_original>
// kernel: tpu_custom_call.1
$region0: #{tpu_custom_call.1}
  #allocation0 [shape = 'u32[]', space=smem, size = 0x4, offset = 0x4, fixed_abs, tag = 'smem constant byte address 0x4 - core index']
  #allocation1 [shape = 'u32[72,128]{1,0:T(1,128)}', space=vmem, size = 0x9000, scoped, tag = 'internal scratch']
  %s0 = inlined_call_operand.vmem [shape: f32[8,3], index: 0, kind: input, shape index: {}]
  %s1 = inlined_call_operand.vmem [shape: f32[8,1], index: 1, kind: input, shape index: {}]
  %s2 = inlined_call_operand.vmem [shape: f32[3,256], index: 2, kind: input, shape index: {}]
  %s3 = inlined_call_operand.vmem [shape: f32[256,8], index: 3, kind: output, shape index: {}]
  %s4 = sld [smem:[#allocation0]]
  $region22: #{tpu_custom_call.1} parent=0
    _
  %s6 = ssub.s32 1, %s4
  %s7 = scalar_select 0, %s6, %s4
  // Predicated region
  $region2: #{tpu_custom_call.1} parent=0 // pred_check
    _
  $region3: #{tpu_custom_call.1} parent=0 // pred_check_branch
    %9 = sbr.rel (0) target = $region5
  $region4: #{tpu_custom_call.1} parent=0 // pred_region
    _
  $region5: #{tpu_custom_call.1} parent=0 // pred_fallthru
    _
  // Predicated region
  $region6: #{tpu_custom_call.1} parent=0 // pred_check
    _
  $region7: #{tpu_custom_call.1} parent=0 // pred_check_branch
    %11 = sbr.rel (0) target = $region9
  $region8: #{tpu_custom_call.1} parent=0 // pred_region
    _
  $region9: #{tpu_custom_call.1} parent=0 // pred_fallthru
    _
  // Predicated region
  $region10: #{tpu_custom_call.1} parent=0 // pred_check
    _
  $region11: #{tpu_custom_call.1} parent=0 // pred_check_branch
    %13 = sbr.rel (0) target = $region13
  $region12: #{tpu_custom_call.1} parent=0 // pred_region
    _
  $region13: #{tpu_custom_call.1} parent=0 // pred_fallthru
    _
  %v14 = vld [vmem:[%s2] ss:$4 sm:$0x3]
  %s15 = scalar_lea.vmem %s2, 1
  %v16 = vld [vmem:[%s15] ss:$4 sm:$0x3]
  %s17 = scalar_lea.vmem %s2, 2
  %v18 = vld [vmem:[%s17] ss:$4 sm:$0x3]
  %v19 = vld [vmem:[%s0] sm:$0xff]
  %v21 = vperm.slane %v14, 0
  %v22 = vperm.slane %v14, 1
  %26 = vset.pattern.permute.xlu0 0
  %27 = vperm.xlu0 %26, %v19
  %v28 = vpop.permute.xlu0 %27
  %v30 = vmul.f32 %v21, %v28
  %v31 = vmul.f32 %v22, %v28
  %v33 = vperm.slane %v16, 0
  %v34 = vperm.slane %v16, 1
  %37 = vset.pattern.permute.xlu0 1
  %38 = vperm.xlu0 %37, %v19
  %v39 = vpop.permute.xlu0 %38
  %v41 = vmul.f32 %v33, %v39
  %v42 = vmul.f32 %v34, %v39
  %v43 = vadd.f32 %v30, %v41
  %v44 = vadd.f32 %v31, %v42
  %v46 = vperm.slane %v18, 0
  %v47 = vperm.slane %v18, 1
  %50 = vset.pattern.permute.xlu0 2
  %51 = vperm.xlu0 %50, %v19
  %v52 = vpop.permute.xlu0 %51
  %v54 = vmul.f32 %v46, %v52
  %v55 = vmul.f32 %v47, %v52
  %v56 = vadd.f32 %v43, %v54
  %v57 = vadd.f32 %v44, %v55
  %v58 = vld [vmem:[%s1] sm:$0xff]
  %60 = vset.pattern.permute.xlu0 0
  %61 = vperm.xlu0 %60, %v58
  %v62 = vpop.permute.xlu0 %61
  %v64 = vadd.f32 %v56, %v62
  %v65 = vadd.f32 %v57, %v62
  %v66 = vmul.f32 %v64, 0.5
  %v67 = vmul.f32 %v65, 0.5
  %v68 = vmul.f32 %v64, 0.035677407
  %v69 = vmul.f32 %v65, 0.035677407
  %v70 = vtanh.pop %v68
  %v71 = vtanh.pop %v69
  %v72 = vadd.f32 %v70, 1.0
  %v73 = vadd.f32 %v71, 1.0
  %v74 = vmul.f32 %v66, %v72
  %v75 = vmul.f32 %v67, %v73
  %76 = vxpose.xlu0.b32.start [1/16] %v74, 128
  %77 = vxpose.xlu0.b32.cont [2/16] 0.0, 128
  %78 = vxpose.xlu0.b32.cont [3/16] 0.0, 128
  %79 = vxpose.xlu0.b32.cont [4/16] 0.0, 128
  %80 = vxpose.xlu0.b32.cont [5/16] 0.0, 128
  %81 = vxpose.xlu0.b32.cont [6/16] 0.0, 128
  %82 = vxpose.xlu0.b32.cont [7/16] 0.0, 128
  %83 = vxpose.xlu0.b32.cont [8/16] 0.0, 128
  %84 = vxpose.xlu0.b32.cont [9/16] 0.0, 128
  %85 = vxpose.xlu0.b32.cont [10/16] 0.0, 128
  %86 = vxpose.xlu0.b32.cont [11/16] 0.0, 128
  %87 = vxpose.xlu0.b32.cont [12/16] 0.0, 128
  %88 = vxpose.xlu0.b32.cont [13/16] 0.0, 128
  %89 = vxpose.xlu0.b32.cont [14/16] 0.0, 128
  %90 = vxpose.xlu0.b32.cont [15/16] 0.0, 128
  %91 = vxpose.xlu0.b32.end [16/16] 0.0, 128
  %v92 = vpop.trf.xlu0
  %v93 = vpop.trf.xlu0
  %v94 = vpop.trf.xlu0
  %v95 = vpop.trf.xlu0
  %v96 = vpop.trf.xlu0
  %v97 = vpop.trf.xlu0
  %v98 = vpop.trf.xlu0
  %v99 = vpop.trf.xlu0
  %v100 = vpop.trf.xlu0
  %v101 = vpop.trf.xlu0
  %v102 = vpop.trf.xlu0
  %v103 = vpop.trf.xlu0
  %v104 = vpop.trf.xlu0
  %v105 = vpop.trf.xlu0
  %v106 = vpop.trf.xlu0
  %v107 = vpop.trf.xlu0
  %108 = vxpose.xlu0.b32.start [1/16] %v75, 128
  %109 = vxpose.xlu0.b32.cont [2/16] 0.0, 128
  %110 = vxpose.xlu0.b32.cont [3/16] 0.0, 128
  %111 = vxpose.xlu0.b32.cont [4/16] 0.0, 128
  %112 = vxpose.xlu0.b32.cont [5/16] 0.0, 128
  %113 = vxpose.xlu0.b32.cont [6/16] 0.0, 128
  %114 = vxpose.xlu0.b32.cont [7/16] 0.0, 128
  %115 = vxpose.xlu0.b32.cont [8/16] 0.0, 128
  %116 = vxpose.xlu0.b32.cont [9/16] 0.0, 128
  %117 = vxpose.xlu0.b32.cont [10/16] 0.0, 128
  %118 = vxpose.xlu0.b32.cont [11/16] 0.0, 128
  %119 = vxpose.xlu0.b32.cont [12/16] 0.0, 128
  %120 = vxpose.xlu0.b32.cont [13/16] 0.0, 128
  %121 = vxpose.xlu0.b32.cont [14/16] 0.0, 128
  %122 = vxpose.xlu0.b32.cont [15/16] 0.0, 128
  %123 = vxpose.xlu0.b32.end [16/16] 0.0, 128
  %v124 = vpop.trf.xlu0
  %v125 = vpop.trf.xlu0
  %v126 = vpop.trf.xlu0
  %v127 = vpop.trf.xlu0
  %v128 = vpop.trf.xlu0
  %v129 = vpop.trf.xlu0
  %v130 = vpop.trf.xlu0
  %v131 = vpop.trf.xlu0
  %v132 = vpop.trf.xlu0
  %v133 = vpop.trf.xlu0
  %v134 = vpop.trf.xlu0
  %v135 = vpop.trf.xlu0
  %v136 = vpop.trf.xlu0
  %v137 = vpop.trf.xlu0
  %v138 = vpop.trf.xlu0
  %v139 = vpop.trf.xlu0
  %vm140 = vcmask 64512
  %141 = vst.msk [vmem:[%s3] sm:$0xff] %vm140, %v92
  %142 = vst.msk [vmem:[%s3 + $0x8] sm:$0xff] %vm140, %v93
  %143 = vst.msk [vmem:[%s3 + $0x10] sm:$0xff] %vm140, %v94
  %144 = vst.msk [vmem:[%s3 + $0x18] sm:$0xff] %vm140, %v95
  %145 = vst.msk [vmem:[%s3 + $0x20] sm:$0xff] %vm140, %v96
  %146 = vst.msk [vmem:[%s3 + $0x28] sm:$0xff] %vm140, %v97
  %147 = vst.msk [vmem:[%s3 + $0x30] sm:$0xff] %vm140, %v98
  %148 = vst.msk [vmem:[%s3 + $0x38] sm:$0xff] %vm140, %v99
  %149 = vst.msk [vmem:[%s3 + $0x40] sm:$0xff] %vm140, %v100
  %150 = vst.msk [vmem:[%s3 + $0x48] sm:$0xff] %vm140, %v101
  %151 = vst.msk [vmem:[%s3 + $0x50] sm:$0xff] %vm140, %v102
  %152 = vst.msk [vmem:[%s3 + $0x58] sm:$0xff] %vm140, %v103
  %153 = vst.msk [vmem:[%s3 + $0x60] sm:$0xff] %vm140, %v104
  %154 = vst.msk [vmem:[%s3 + $0x68] sm:$0xff] %vm140, %v105
  %155 = vst.msk [vmem:[%s3 + $0x70] sm:$0xff] %vm140, %v106
  %156 = vst.msk [vmem:[%s3 + $0x78] sm:$0xff] %vm140, %v107
  %157 = vst.msk [vmem:[%s3 + $0x80] sm:$0xff] %vm140, %v124
  %158 = vst.msk [vmem:[%s3 + $0x88] sm:$0xff] %vm140, %v125
  %159 = vst.msk [vmem:[%s3 + $0x90] sm:$0xff] %vm140, %v126
  %160 = vst.msk [vmem:[%s3 + $0x98] sm:$0xff] %vm140, %v127
  %161 = vst.msk [vmem:[%s3 + $0xa0] sm:$0xff] %vm140, %v128
  %162 = vst.msk [vmem:[%s3 + $0xa8] sm:$0xff] %vm140, %v129
  %163 = vst.msk [vmem:[%s3 + $0xb0] sm:$0xff] %vm140, %v130
  %164 = vst.msk [vmem:[%s3 + $0xb8] sm:$0xff] %vm140, %v131
  %165 = vst.msk [vmem:[%s3 + $0xc0] sm:$0xff] %vm140, %v132
  %166 = vst.msk [vmem:[%s3 + $0xc8] sm:$0xff] %vm140, %v133
  %167 = vst.msk [vmem:[%s3 + $0xd0] sm:$0xff] %vm140, %v134
  %168 = vst.msk [vmem:[%s3 + $0xd8] sm:$0xff] %vm140, %v135
  %169 = vst.msk [vmem:[%s3 + $0xe0] sm:$0xff] %vm140, %v136
  %170 = vst.msk [vmem:[%s3 + $0xe8] sm:$0xff] %vm140, %v137
  %171 = vst.msk [vmem:[%s3 + $0xf0] sm:$0xff] %vm140, %v138
  %172 = vst.msk [vmem:[%s3 + $0xf8] sm:$0xff] %vm140, %v139
  // Predicated region
  $region14: #{tpu_custom_call.1} parent=0 // pred_check
    _
  $region15: #{tpu_custom_call.1} parent=0 // pred_check_branch
    %174 = sbr.rel (0) target = $region17
  $region16: #{tpu_custom_call.1} parent=0 // pred_region
    _
  $region17: #{tpu_custom_call.1} parent=0 // pred_fallthru
    _
  // Predicated region
  $region18: #{tpu_custom_call.1} parent=0 // pred_check
    _
  $region19: #{tpu_custom_call.1} parent=0 // pred_check_branch
    %176 = sbr.rel (0) target = $region21
  $region20: #{tpu_custom_call.1} parent=0 // pred_region
    _
  $region21: #{tpu_custom_call.1} parent=0 // pred_fallthru
    _

</llo_original>
